<compile_context>
chip_gen: v7x
topology: tpu7x:2x2x1
jax: 0.10.0
libtpu: 0.0.40
codegen_flags: <defaults>
</compile_context>

<pallas_src>
import functools

import jax
import jax.numpy as jnp
from jax.experimental import pallas as pl
from jax.experimental.pallas import tpu as pltpu


# ---------------------------------------------------------------------------
# Kernels
# ---------------------------------------------------------------------------

def _mlp_apply(x, w1t, b1, w2t, b2, compute_dtype):
    """z = tanh(x @ w1t + b1) @ w2t + b2 with f32 accumulation on the MXU."""
    h = jnp.dot(x.astype(compute_dtype), w1t,
                preferred_element_type=jnp.float32)
    h = jnp.tanh(h + b1)
    z = jnp.dot(h.astype(compute_dtype), w2t,
                preferred_element_type=jnp.float32) + b2
    return z


def _mlp_kernel(x_ref, w1t_ref, b1_ref, w2t_ref, b2_ref, o_ref):
    # x_ref   : (block_m, dim)        input dtype
    # w1t_ref : (dim, dim_hidden)     compute dtype (grid-resident)
    # b1_ref  : (1, dim_hidden)       f32
    # w2t_ref : (dim_hidden, dim)     compute dtype (grid-resident)
    # b2_ref  : (1, dim)              f32
    # o_ref   : (block_m, dim)        out dtype
    cd = w1t_ref.dtype
    z = _mlp_apply(x_ref[...], w1t_ref[...], b1_ref[...], w2t_ref[...],
                   b2_ref[...], cd)
    o_ref[...] = z.astype(o_ref.dtype)


def _euler_kernel(x_ref, w1t_ref, b1_ref, w2t_ref, b2_ref, o_ref, *,
                  num_steps, dt):
    """Fused explicit-Euler integrator: x <- x + dt * fn(x), num_steps times.

    Weights and the state tile stay VMEM-resident across all steps; there is
    exactly one HBM read and one HBM write of the state per pallas_call.
    """
    cd = w1t_ref.dtype
    w1t = w1t_ref[...]
    w2t = w2t_ref[...]
    b1 = b1_ref[...]
    b2 = b2_ref[...]

    def step(_, xc):
        return xc + dt * _mlp_apply(xc, w1t, b1, w2t, b2, cd)

    x0 = x_ref[...].astype(jnp.float32)
    xn = jax.lax.fori_loop(0, num_steps, step, x0, unroll=(num_steps <= 8))
    o_ref[...] = xn.astype(o_ref.dtype)


# ---------------------------------------------------------------------------
# Wrappers
# ---------------------------------------------------------------------------

def _choose_block_m(m, max_block_m):
    """One grid step when the batch fits a single tile; otherwise tile at
    max_block_m rows (multiple of 8) and let Pallas mask the ragged tail."""
    return m if m <= max_block_m else max_block_m


def _vmem_limit_bytes(block_m, dim, dim_hidden, in_bytes, out_bytes,
                      compute_bytes):
    """Explicit VMEM budget: double-buffered activation tiles + resident
    weights/biases + f32 hidden intermediate, with generous headroom."""
    tiles = 2 * block_m * dim * (in_bytes + out_bytes)          # dbl-buffered
    weights = 2 * dim * dim_hidden * compute_bytes + (dim + dim_hidden) * 4
    interm = block_m * dim_hidden * 4
    need = tiles + 2 * weights + interm
    return int(min(max(4 * need, 16 << 20), 64 << 20))


def _param_specs(dim, dim_hidden):
    return [
        pl.BlockSpec((dim, dim_hidden), lambda i: (0, 0)),   # w1^T (resident)
        pl.BlockSpec((1, dim_hidden), lambda i: (0, 0)),     # b1
        pl.BlockSpec((dim_hidden, dim), lambda i: (0, 0)),    # w2^T (resident)
        pl.BlockSpec((1, dim), lambda i: (0, 0)),             # b2
    ]


@functools.partial(
    jax.jit, static_argnames=("compute_dtype", "out_dtype", "max_block_m"))
def mlp_pallas(x, w1, b1, w2, b2, *, compute_dtype=jnp.float32,
               out_dtype=None, max_block_m=512):
    """z = tanh(x @ w1.T + b1) @ w2.T + b2   (PyTorch nn.Linear layouts).

    x: (m, dim); w1: (dim_hidden, dim); b1: (dim_hidden,);
    w2: (dim, dim_hidden); b2: (dim,).
    """
    m, dim = x.shape
    dim_hidden = w1.shape[0]
    out_dtype = x.dtype if out_dtype is None else out_dtype

    block_m = _choose_block_m(m, max_block_m)
    grid = (pl.cdiv(m, block_m),)

    # Only the ~8 KiB parameter tensors are touched in the wrapper; the
    # activations flow into / out of the kernel with no transpose/pad/slice.
    w1t = w1.T.astype(compute_dtype)                     # (dim, dim_hidden)
    w2t = w2.T.astype(compute_dtype)                     # (dim_hidden, dim)
    b1r = b1.reshape(1, dim_hidden).astype(jnp.float32)
    b2r = b2.reshape(1, dim).astype(jnp.float32)

    cb = jnp.dtype(compute_dtype).itemsize
    ob = jnp.dtype(out_dtype).itemsize
    cost = pl.CostEstimate(
        flops=2 * m * dim * dim_hidden * 2,
        transcendentals=m * dim_hidden,
        bytes_accessed=(m * dim * (x.dtype.itemsize + ob)
                        + 2 * dim * dim_hidden * cb
                        + (dim + dim_hidden) * 4),
    )

    return pl.pallas_call(
        _mlp_kernel,
        out_shape=jax.ShapeDtypeStruct((m, dim), out_dtype),
        grid_spec=pltpu.PrefetchScalarGridSpec(
            num_scalar_prefetch=0,
            grid=grid,
            in_specs=[pl.BlockSpec((block_m, dim), lambda i: (i, 0))]
                     + _param_specs(dim, dim_hidden),
            out_specs=pl.BlockSpec((block_m, dim), lambda i: (i, 0)),
        ),
        compiler_params=pltpu.CompilerParams(
            dimension_semantics=("parallel",),
            vmem_limit_bytes=_vmem_limit_bytes(
                block_m, dim, dim_hidden, x.dtype.itemsize, ob, cb)),
        cost_estimate=cost,
    )(x, w1t, b1r, w2t, b2r)


@functools.partial(
    jax.jit,
    static_argnames=("num_steps", "dt", "compute_dtype", "max_block_m"))
def euler_integrate_pallas(x0, w1, b1, w2, b2, *, num_steps, dt,
                           compute_dtype=jnp.float32, max_block_m=512):
    """num_steps explicit-Euler steps of dx/dt = fn(x), fused into ONE
    pallas_call (weights + state VMEM-resident; state aliased in place)."""
    m, dim = x0.shape
    dim_hidden = w1.shape[0]
    block_m = _choose_block_m(m, max_block_m)
    grid = (pl.cdiv(m, block_m),)

    w1t = w1.T.astype(compute_dtype)
    w2t = w2.T.astype(compute_dtype)
    b1r = b1.reshape(1, dim_hidden).astype(jnp.float32)
    b2r = b2.reshape(1, dim).astype(jnp.float32)

    cb = jnp.dtype(compute_dtype).itemsize
    xb = x0.dtype.itemsize
    cost = pl.CostEstimate(
        flops=2 * m * dim * dim_hidden * 2 * num_steps,
        transcendentals=m * dim_hidden * num_steps,
        bytes_accessed=(2 * m * dim * xb
                        + 2 * dim * dim_hidden * cb
                        + (dim + dim_hidden) * 4),
    )

    kernel = functools.partial(_euler_kernel, num_steps=num_steps,
                               dt=float(dt))
    return pl.pallas_call(
        kernel,
        out_shape=jax.ShapeDtypeStruct((m, dim), x0.dtype),
        grid_spec=pltpu.PrefetchScalarGridSpec(
            num_scalar_prefetch=0,
            grid=grid,
            in_specs=[pl.BlockSpec((block_m, dim), lambda i: (i, 0))]
                     + _param_specs(dim, dim_hidden),
            out_specs=pl.BlockSpec((block_m, dim), lambda i: (i, 0)),
        ),
        compiler_params=pltpu.CompilerParams(
            dimension_semantics=("parallel",),
            vmem_limit_bytes=_vmem_limit_bytes(
                block_m, dim, dim_hidden, xb, xb, cb)),
        cost_estimate=cost,
        input_output_aliases={0: 0},
    )(x0, w1t, b1r, w2t, b2r)


def init_noode_params(key, dim, dim_hidden, dtype=jnp.float32):
    """nn.Linear-style uniform(-1/sqrt(fan_in), +) init, PyTorch layouts:
    w1 (dim_hidden, dim), w2 (dim, dim_hidden)."""
    k1, k2, k3, k4 = jax.random.split(key, 4)
    bound1 = 1.0 / (dim ** 0.5)
    bound2 = 1.0 / (dim_hidden ** 0.5)
    w1 = jax.random.uniform(k1, (dim_hidden, dim), dtype, -bound1, bound1)
    b1 = jax.random.uniform(k2, (dim_hidden,), dtype, -bound1, bound1)
    w2 = jax.random.uniform(k3, (dim, dim_hidden), dtype, -bound2, bound2)
    b2 = jax.random.uniform(k4, (dim,), dtype, -bound2, bound2)
    return w1, b1, w2, b2


def noode_func(t, x, params, *, compute_dtype=jnp.float32):
    """Pallas-backed equivalent of NOODEFunc.forward(t, x).

    x is a tuple of (batch, dim) arrays; returns a tuple of the same length:
    element 0 is fn(x[0]); element i (i>0) is x[i-1]."""
    del t  # unused by the module's forward, kept for API parity
    assert isinstance(x, tuple)
    w1, b1, w2, b2 = params
    z = mlp_pallas(x[0], w1, b1, w2, b2, compute_dtype=compute_dtype)
    return tuple([x[i - 1] if i else z for i in range(len(x))])


# ---------------------------------------------------------------------------
# Self-test
# ---------------------------------------------------------------------------

if __name__ == "__main__":
    key = jax.random.PRNGKey(0)
    batch, dim, dim_hidden = 8, 32, 64
    tuple_len = 3

    kp, *kx = jax.random.split(key, 1 + tuple_len)
    params = init_noode_params(kp, dim, dim_hidden)
    w1, b1, w2, b2 = params
    x = tuple(jax.random.normal(k, (batch, dim), jnp.float32) for k in kx)
    t = jnp.float32(0.0)

    # --- single-step forward (the module's semantics), f32 parity path ---
    out = jax.block_until_ready(noode_func(t, x, params))
    z_ref = jnp.tanh(x[0] @ w1.T + b1) @ w2.T + b2
    assert len(out) == tuple_len
    assert out[0].shape == (batch, dim)
    assert out[0].dtype == x[0].dtype
    assert jnp.allclose(out[0], z_ref, atol=2e-2, rtol=2e-2), (
        float(jnp.max(jnp.abs(out[0] - z_ref))))
    for i in range(1, tuple_len):
        assert jnp.array_equal(out[i], x[i - 1])

    # --- bf16-operand MXU path ---
    z_bf = jax.block_until_ready(
        mlp_pallas(x[0], w1, b1, w2, b2, compute_dtype=jnp.bfloat16))
    h_b = jnp.tanh(jnp.dot(x[0].astype(jnp.bfloat16),
                           w1.T.astype(jnp.bfloat16),
                           preferred_element_type=jnp.float32) + b1)
    z_b_ref = (jnp.dot(h_b.astype(jnp.bfloat16), w2.T.astype(jnp.bfloat16),
                       preferred_element_type=jnp.float32) + b2)
    assert jnp.allclose(z_bf, z_b_ref, atol=2e-2, rtol=2e-2), (
        float(jnp.max(jnp.abs(z_bf - z_b_ref))))

    # --- fused multi-step integrator (weights VMEM-resident across steps) ---
    num_steps, dt = 4, 0.1
    x_n = jax.block_until_ready(
        euler_integrate_pallas(x[0], w1, b1, w2, b2,
                               num_steps=num_steps, dt=dt))
    x_ref_state = x[0]
    for _ in range(num_steps):
        x_ref_state = x_ref_state + dt * (
            jnp.tanh(x_ref_state @ w1.T + b1) @ w2.T + b2)
    assert x_n.shape == (batch, dim)
    assert jnp.allclose(x_n, x_ref_state, atol=2e-2, rtol=2e-2), (
        float(jnp.max(jnp.abs(x_n - x_ref_state))))

    print("KERNEL_OK")
</pallas_src>

<mosaic_0001>
module attributes {stable_mosaic.version = 11 : i64} {
  func.func @_mlp_kernel(%arg0: i32, %arg1: memref<8x32xf32, #tpu.memory_space<vmem>>, %arg2: memref<32x64xf32, #tpu.memory_space<vmem>>, %arg3: memref<1x64xf32, #tpu.memory_space<vmem>>, %arg4: memref<64x32xf32, #tpu.memory_space<vmem>>, %arg5: memref<1x32xf32, #tpu.memory_space<vmem>>, %arg6: memref<8x32xf32, #tpu.memory_space<vmem>>) attributes {dimension_semantics = [#tpu.dimension_semantics<parallel>], iteration_bounds = array<i64: 1>, scalar_prefetch = 0 : i64, scratch_operands = 0 : i64, tpu.core_type = #tpu.core_type<tc>, window_params = [{transform_indices = @transform_0, window_bounds = array<i64: 8, 32>}, {pipeline_mode = #tpu.pipeline_mode<synchronous>, transform_indices = @transform_1, window_bounds = array<i64: 32, 64>}, {pipeline_mode = #tpu.pipeline_mode<synchronous>, transform_indices = @transform_2, window_bounds = array<i64: 1, 64>}, {pipeline_mode = #tpu.pipeline_mode<synchronous>, transform_indices = @transform_3, window_bounds = array<i64: 64, 32>}, {pipeline_mode = #tpu.pipeline_mode<synchronous>, transform_indices = @transform_4, window_bounds = array<i64: 1, 32>}, {transform_indices = @transform_5, window_bounds = array<i64: 8, 32>}]} {
    %c0 = arith.constant 0 : index
    %c0_0 = arith.constant 0 : index
    %0 = vector.load %arg1[%c0, %c0_0] : memref<8x32xf32, #tpu.memory_space<vmem>>, vector<8x32xf32>
    %c0_1 = arith.constant 0 : index
    %c0_2 = arith.constant 0 : index
    %1 = vector.load %arg2[%c0_1, %c0_2] : memref<32x64xf32, #tpu.memory_space<vmem>>, vector<32x64xf32>
    %c0_3 = arith.constant 0 : index
    %c0_4 = arith.constant 0 : index
    %2 = vector.load %arg3[%c0_3, %c0_4] : memref<1x64xf32, #tpu.memory_space<vmem>>, vector<1x64xf32>
    %c0_5 = arith.constant 0 : index
    %c0_6 = arith.constant 0 : index
    %3 = vector.load %arg4[%c0_5, %c0_6] : memref<64x32xf32, #tpu.memory_space<vmem>>, vector<64x32xf32>
    %c0_7 = arith.constant 0 : index
    %c0_8 = arith.constant 0 : index
    %4 = vector.load %arg5[%c0_7, %c0_8] : memref<1x32xf32, #tpu.memory_space<vmem>>, vector<1x32xf32>
    %cst = arith.constant dense<0.000000e+00> : vector<8x64xf32>
    %5 = tpu.matmul %0, %1, %cst {dimension_numbers = #tpu.dot_dimension_numbers<[1], [0], [0], [1], [0, 0, 1, 1], [], []>} : vector<8x32xf32>, vector<32x64xf32>, vector<8x64xf32> -> vector<8x64xf32>
    %6 = vector.broadcast %2 : vector<1x64xf32> to vector<8x64xf32>
    %7 = arith.addf %5, %6 : vector<8x64xf32>
    %8 = math.tanh %7 : vector<8x64xf32>
    %cst_9 = arith.constant dense<0.000000e+00> : vector<8x32xf32>
    %9 = tpu.matmul %8, %3, %cst_9 {dimension_numbers = #tpu.dot_dimension_numbers<[1], [0], [0], [1], [0, 0, 1, 1], [], []>} : vector<8x64xf32>, vector<64x32xf32>, vector<8x32xf32> -> vector<8x32xf32>
    %10 = vector.broadcast %4 : vector<1x32xf32> to vector<8x32xf32>
    %11 = arith.addf %9, %10 : vector<8x32xf32>
    %c0_10 = arith.constant 0 : index
    %c0_11 = arith.constant 0 : index
    %12 = vector.load %arg6[%c0_10, %c0_11] : memref<8x32xf32, #tpu.memory_space<vmem>>, vector<8x32xf32>
    tpu.vector_store %arg6[%c0_10, %c0_11], %11 {strides = array<i32>} : memref<8x32xf32, #tpu.memory_space<vmem>>, vector<8x32xf32>,
    return
  }
  func.func @transform_0(%arg0: i32) -> (i32, i32) {
    %c0_i32 = arith.constant 0 : i32
    %c0_i32_0 = arith.constant 0 : i32
    return %arg0, %c0_i32 : i32, i32
  }
  func.func @transform_1(%arg0: i32) -> (i32, i32) {
    %c0_i32 = arith.constant 0 : i32
    %c0_i32_0 = arith.constant 0 : i32
    %c0_i32_1 = arith.constant 0 : i32
    return %c0_i32, %c0_i32_0 : i32, i32
  }
  func.func @transform_2(%arg0: i32) -> (i32, i32) {
    %c0_i32 = arith.constant 0 : i32
    %c0_i32_0 = arith.constant 0 : i32
    %c0_i32_1 = arith.constant 0 : i32
    return %c0_i32, %c0_i32_0 : i32, i32
  }
  func.func @transform_3(%arg0: i32) -> (i32, i32) {
    %c0_i32 = arith.constant 0 : i32
    %c0_i32_0 = arith.constant 0 : i32
    %c0_i32_1 = arith.constant 0 : i32
    return %c0_i32, %c0_i32_0 : i32, i32
  }
  func.func @transform_4(%arg0: i32) -> (i32, i32) {
    %c0_i32 = arith.constant 0 : i32
    %c0_i32_0 = arith.constant 0 : i32
    %c0_i32_1 = arith.constant 0 : i32
    return %c0_i32, %c0_i32_0 : i32, i32
  }
  func.func @transform_5(%arg0: i32) -> (i32, i32) {
    %c0_i32 = arith.constant 0 : i32
    %c0_i32_0 = arith.constant 0 : i32
    return %arg0, %c0_i32 : i32, i32
  }
}

</mosaic_0001>

<llo_original>
// kernel: mlp_pallas.1
$region0: #{mlp_pallas.1}
  #allocation0 [shape = 'u32[]', space=smem, size = 0x4, offset = 0x4, fixed_abs, tag = 'smem constant byte address 0x4 - core index']
  #allocation1 [shape = 'u32[144,128]{1,0:T(1,128)}', space=vmem, size = 0x12000, scoped, tag = 'internal scratch']
  %s0 = inlined_call_operand.vmem [shape: f32[8,32], index: 0, kind: input, shape index: {}]
  %s1 = inlined_call_operand.vmem [shape: f32[32,64], index: 1, kind: input, shape index: {}]
  %s2 = inlined_call_operand.vmem [shape: f32[1,64], index: 2, kind: input, shape index: {}]
  %s3 = inlined_call_operand.vmem [shape: f32[64,32], index: 3, kind: input, shape index: {}]
  %s4 = inlined_call_operand.vmem [shape: f32[1,32], index: 4, kind: input, shape index: {}]
  %s5 = inlined_call_operand.hbm [shape: f32[8,32], index: 5, kind: output, shape index: {}]
  %s6 = sld [smem:[#allocation0]]
  $region30: #{mlp_pallas.1} parent=0
    _
  %s8 = ssub.s32 1, %s6
  %s9 = scalar_select 0, %s8, %s6
  $region1: #{mlp_pallas.1} parent=0
    #allocation2 [shape = 'u8[4096]{0}', space=vmem, size = 0x1000, scoped, tag = 'output window, operand 0, single buffered']
    #allocation3 [shape = 's32[1]{0}', space=sflag, size = 0x4, scoped, tag = 'scoped memory for mlp_pallas.1']
    %10 = vsyncpa [#allocation3], 0
    // Predicated region
    $region2: #{mlp_pallas.1} parent=1 // pred_check
      _
    $region3: #{mlp_pallas.1} parent=1 // pred_check_branch
      %12 = sbr.rel (0) target = $region5
    $region4: #{mlp_pallas.1} parent=1 // pred_region
      _
    $region5: #{mlp_pallas.1} parent=1 // pred_fallthru
      _
    // Predicated region
    $region6: #{mlp_pallas.1} parent=1 // pred_check
      _
    $region7: #{mlp_pallas.1} parent=1 // pred_check_branch
      %14 = sbr.rel (0) target = $region9
    $region8: #{mlp_pallas.1} parent=1 // pred_region
      _
    $region9: #{mlp_pallas.1} parent=1 // pred_fallthru
      _
    // Predicated region
    $region10: #{mlp_pallas.1} parent=1 // pred_check
      _
    $region11: #{mlp_pallas.1} parent=1 // pred_check_branch
      %16 = sbr.rel (0) target = $region13
    $region12: #{mlp_pallas.1} parent=1 // pred_region
      _
    $region13: #{mlp_pallas.1} parent=1 // pred_fallthru
      _
    // Predicated region
    $region14: #{mlp_pallas.1} parent=1 // pred_check
      _
    $region15: #{mlp_pallas.1} parent=1 // pred_check_branch
      %18 = sbr.rel (0) target = $region17
    $region16: #{mlp_pallas.1} parent=1 // pred_region
      _
    $region17: #{mlp_pallas.1} parent=1 // pred_fallthru
      _
    // Predicated region
    $region18: #{mlp_pallas.1} parent=1 // pred_check
      _
    $region19: #{mlp_pallas.1} parent=1 // pred_check_branch
      %20 = sbr.rel (0) target = $region21
    $region20: #{mlp_pallas.1} parent=1 // pred_region
      _
    $region21: #{mlp_pallas.1} parent=1 // pred_fallthru
      _
    %v21 = vld [vmem:[%s0] sm:$0xff]
    %v22 = vld [vmem:[%s1] sm:$0xff]
    %v23 = vld [vmem:[%s1 + $0x8] sm:$0xff]
    %v24 = vld [vmem:[%s1 + $0x10] sm:$0xff]
    %v25 = vld [vmem:[%s1 + $0x18] sm:$0xff]
    %v26 = vld [vmem:[%s2] sm:$0x1]
    %v27 = vld [vmem:[%s3] sm:$0xff]
    %v28 = vld [vmem:[%s3 + $0x8] sm:$0xff]
    %v29 = vld [vmem:[%s3 + $0x10] sm:$0xff]
    %v30 = vld [vmem:[%s3 + $0x18] sm:$0xff]
    %v31 = vld [vmem:[%s3 + $0x20] sm:$0xff]
    %v32 = vld [vmem:[%s3 + $0x28] sm:$0xff]
    %v33 = vld [vmem:[%s3 + $0x30] sm:$0xff]
    %v34 = vld [vmem:[%s3 + $0x38] sm:$0xff]
    %v35 = vld [vmem:[%s4] sm:$0x1]
    %v37 = vlaneseq
    %v38 = vshrl.u32 %v37, 7
    %v39 = vsub.s32 0, %v38
    %v40 = vrot.slane %v26, %v39
    %vm42 = vcmask 261120
    %v44 = vsel %vm42, %v21, 0
    %46 = vmatprep.subr.mxu0 0.0
    %47 = vmatpush1.msra.mxu0 %v22
    %48 = vmatprep.subr.mxu0 0.0
    %49 = vmatpush1.msra.mxu0 %v23
    %50 = vmatprep.subr.mxu0 0.0
    %51 = vmatpush1.msra.mxu0 %v24
    %52 = vmatprep.subr.mxu0 0.0
    %53 = vmatpush1.msra.mxu0 %v25
    %54 = vmatprep.subr.mxu0 0.0
    %55 = vmatpush1.msra.mxu0 0.0
    %56 = vmatprep.subr.mxu0 0.0
    %57 = vmatpush1.msra.mxu0 0.0
    %58 = vmatprep.subr.mxu0 0.0
    %59 = vmatpush1.msra.mxu0 0.0
    %60 = vmatprep.subr.mxu0 0.0
    %61 = vmatpush1.msra.mxu0 0.0
    %62 = vmatprep.subr.mxu0 0.0
    %63 = vmatpush1.msra.mxu0 0.0
    %64 = vmatprep.subr.mxu0 0.0
    %65 = vmatpush1.msra.mxu0 0.0
    %66 = vmatprep.subr.mxu0 0.0
    %67 = vmatpush1.msra.mxu0 0.0
    %68 = vmatprep.subr.mxu0 0.0
    %69 = vmatpush1.msra.mxu0 0.0
    %70 = vmatprep.subr.mxu0 0.0
    %71 = vmatpush1.msra.mxu0 0.0
    %72 = vmatprep.subr.mxu0 0.0
    %73 = vmatpush1.msra.mxu0 0.0
    %74 = vmatprep.subr.mxu0 0.0
    %75 = vmatpush1.msra.mxu0 0.0
    %76 = vmatprep.subr.mxu0 0.0
    %77 = vmatpush1.msra.mxu0 0.0
    %78 = vmatprep.subr.mxu0 0.0
    %79 = vmatpush1.msra.mxu0 0.0
    %80 = vmatprep.subr.mxu0 0.0
    %81 = vmatpush1.msra.mxu0 0.0
    %82 = vmatprep.subr.mxu0 0.0
    %83 = vmatpush1.msra.mxu0 0.0
    %84 = vmatprep.subr.mxu0 0.0
    %85 = vmatpush1.msra.mxu0 0.0
    %86 = vmatprep.subr.mxu0 0.0
    %87 = vmatpush1.msra.mxu0 0.0
    %88 = vmatprep.subr.mxu0 0.0
    %89 = vmatpush1.msra.mxu0 0.0
    %90 = vmatprep.subr.mxu0 0.0
    %91 = vmatpush1.msra.mxu0 0.0
    %92 = vmatprep.subr.mxu0 0.0
    %93 = vmatpush1.msra.mxu0 0.0
    %94 = vmatprep.subr.mxu0 0.0
    %95 = vmatpush1.msra.mxu0 0.0
    %96 = vmatprep.subr.mxu0 0.0
    %97 = vmatpush1.msra.mxu0 0.0
    %98 = vmatprep.subr.mxu0 0.0
    %99 = vmatpush1.msra.mxu0 0.0
    %100 = vmatprep.subr.mxu0 0.0
    %101 = vmatpush1.msra.mxu0 0.0
    %102 = vmatprep.subr.mxu0 0.0
    %103 = vmatpush1.msra.mxu0 0.0
    %104 = vmatprep.subr.mxu0 0.0
    %105 = vmatpush1.msra.mxu0 0.0
    %106 = vmatprep.subr.mxu0 0.0
    %107 = vmatpush1.msra.mxu0 0.0
    %108 = vmatprep.subr.mxu0 0.0
    %109 = vmatpush1.msra.mxu0 0.0
    %110 = vmatprep.mubr.f32.mxu0 0.0
    %111 = vmatmul.mubr.f32.gmra.mrb[0].mxu0 %v44
    %v112 = vpop.f32.mrb[0].mxu0
    %v113 = vadd.f32 %v40, %v112
    %v114 = vpop.f32.mrb[0].mxu0
    %115 = vdwg.mxu0
    %v116 = vtanh.pop %v113
    %v118 = vlaneseq
    %v119 = vshrl.u32 %v118, 7
    %v120 = vsub.s32 0, %v119
    %v121 = vrot.slane %v35, %v120
    %vm123 = vcmask 523264
    %v125 = vsel %vm123, %v116, 0
    %127 = vmatprep.subr.mxu0 0.0
    %128 = vmatpush1.msra.mxu0 %v27
    %129 = vmatprep.subr.mxu0 0.0
    %130 = vmatpush1.msra.mxu0 %v28
    %131 = vmatprep.subr.mxu0 0.0
    %132 = vmatpush1.msra.mxu0 %v29
    %133 = vmatprep.subr.mxu0 0.0
    %134 = vmatpush1.msra.mxu0 %v30
    %135 = vmatprep.subr.mxu0 0.0
    %136 = vmatpush1.msra.mxu0 %v31
    %137 = vmatprep.subr.mxu0 0.0
    %138 = vmatpush1.msra.mxu0 %v32
    %139 = vmatprep.subr.mxu0 0.0
    %140 = vmatpush1.msra.mxu0 %v33
    %141 = vmatprep.subr.mxu0 0.0
    %142 = vmatpush1.msra.mxu0 %v34
    %143 = vmatprep.subr.mxu0 0.0
    %144 = vmatpush1.msra.mxu0 0.0
    %145 = vmatprep.subr.mxu0 0.0
    %146 = vmatpush1.msra.mxu0 0.0
    %147 = vmatprep.subr.mxu0 0.0
    %148 = vmatpush1.msra.mxu0 0.0
    %149 = vmatprep.subr.mxu0 0.0
    %150 = vmatpush1.msra.mxu0 0.0
    %151 = vmatprep.subr.mxu0 0.0
    %152 = vmatpush1.msra.mxu0 0.0
    %153 = vmatprep.subr.mxu0 0.0
    %154 = vmatpush1.msra.mxu0 0.0
    %155 = vmatprep.subr.mxu0 0.0
    %156 = vmatpush1.msra.mxu0 0.0
    %157 = vmatprep.subr.mxu0 0.0
    %158 = vmatpush1.msra.mxu0 0.0
    %159 = vmatprep.subr.mxu0 0.0
    %160 = vmatpush1.msra.mxu0 0.0
    %161 = vmatprep.subr.mxu0 0.0
    %162 = vmatpush1.msra.mxu0 0.0
    %163 = vmatprep.subr.mxu0 0.0
    %164 = vmatpush1.msra.mxu0 0.0
    %165 = vmatprep.subr.mxu0 0.0
    %166 = vmatpush1.msra.mxu0 0.0
    %167 = vmatprep.subr.mxu0 0.0
    %168 = vmatpush1.msra.mxu0 0.0
    %169 = vmatprep.subr.mxu0 0.0
    %170 = vmatpush1.msra.mxu0 0.0
    %171 = vmatprep.subr.mxu0 0.0
    %172 = vmatpush1.msra.mxu0 0.0
    %173 = vmatprep.subr.mxu0 0.0
    %174 = vmatpush1.msra.mxu0 0.0
    %175 = vmatprep.subr.mxu0 0.0
    %176 = vmatpush1.msra.mxu0 0.0
    %177 = vmatprep.subr.mxu0 0.0
    %178 = vmatpush1.msra.mxu0 0.0
    %179 = vmatprep.subr.mxu0 0.0
    %180 = vmatpush1.msra.mxu0 0.0
    %181 = vmatprep.subr.mxu0 0.0
    %182 = vmatpush1.msra.mxu0 0.0
    %183 = vmatprep.subr.mxu0 0.0
    %184 = vmatpush1.msra.mxu0 0.0
    %185 = vmatprep.subr.mxu0 0.0
    %186 = vmatpush1.msra.mxu0 0.0
    %187 = vmatprep.subr.mxu0 0.0
    %188 = vmatpush1.msra.mxu0 0.0
    %189 = vmatprep.subr.mxu0 0.0
    %190 = vmatpush1.msra.mxu0 0.0
    %191 = vmatprep.mubr.f32.mxu0 0.0
    %192 = vmatmul.mubr.f32.gmra.mrb[0].mxu0 %v125
    %v193 = vpop.f32.mrb[0].mxu0
    %v194 = vadd.f32 %v121, %v193
    %v195 = vpop.f32.mrb[0].mxu0
    %196 = vdwg.mxu0
    %197 = vst.msk [vmem:[#allocation2] sm:$0xff] %vm42, %v194
    // Predicated region
    $region22: #{mlp_pallas.1} parent=1 // pred_check
      _
    $region23: #{mlp_pallas.1} parent=1 // pred_check_branch
      %199 = sbr.rel (0) target = $region25
    $region24: #{mlp_pallas.1} parent=1 // pred_region
      %s201 = ssub.s32 128, 128
      %202 = vsyncadd [#allocation3], %s201
      %s204 = sshll.u32 [#allocation2], 4
      %s205 = int_to_ptr.vmem [resolvable:$true] %s204
      %207 = dma.vmem_to_hbm [thread:$0]  %s205, 128, %s5, [#allocation3]
    $region25: #{mlp_pallas.1} parent=1 // pred_fallthru
      _
    // Predicated region
    $region26: #{mlp_pallas.1} parent=1 // pred_check
      _
    $region27: #{mlp_pallas.1} parent=1 // pred_check_branch
      %209 = sbr.rel (0) target = $region29
    $region28: #{mlp_pallas.1} parent=1 // pred_region
      %210 = dma.done [#allocation3], 128
    $region29: #{mlp_pallas.1} parent=1 // pred_fallthru
      _
    %211 = vsyncpa [#allocation3], 1

</llo_original>
